<compile_context>
chip_gen: v6e
topology: v6e:2x2x1
jax: 0.10.0
libtpu: 0.0.40
codegen_flags: <defaults>
</compile_context>

<pallas_src>
import functools

import jax
import jax.numpy as jnp
from jax import lax
from jax.experimental import pallas as pl
from jax.experimental.pallas import tpu as pltpu

_EPS = 1e-6  # matches nn.CosineSimilarity(dim=-1, eps=1e-06)

_TARGET_BLOCK_ELEMS = 512 * 1024      # ~2 MiB per f32 input block
_VMEM_LIMIT_BYTES = 32 * 1024 * 1024  # explicit scoped-VMEM budget, all gens


def _negcos_kernel(x_ref, y_ref, out_ref, *, n_rows, tile_rows):
    """Per-tile partial sum of cosine similarities (masked for the tail tile)."""
    i = pl.program_id(0)

    x = x_ref[...].astype(jnp.float32)            # (tile_rows, D)
    y = y_ref[...].astype(jnp.float32)

    dot = jnp.sum(x * y, axis=-1, keepdims=True)  # (tile_rows, 1)
    w1 = jnp.sum(x * x, axis=-1, keepdims=True)
    w2 = jnp.sum(y * y, axis=-1, keepdims=True)
    # torch cosine_similarity: w12 / sqrt(clamp_min(w1*w2, eps^2)).
    # rsqrt keeps this on the EUP slot instead of a VALU divide.
    cos = dot * lax.rsqrt(jnp.maximum(w1 * w2, jnp.float32(_EPS * _EPS)))

    # Mask rows past the true end of the input: the tail block's VMEM contents
    # beyond the array bounds are unspecified (possibly NaN/Inf) — jnp.where
    # selects 0.0 for those rows regardless.
    row_ids = i * tile_rows + lax.broadcasted_iota(jnp.int32, (tile_rows, 1), 0)
    cos = jnp.where(row_ids < n_rows, cos, 0.0)

    partial = jnp.sum(cos)                        # scalar per-tile partial sum

    # Write the partial into a lane-dense (8, 128) block: value at [0, 0],
    # zeros elsewhere, so a plain jnp.sum over the stacked output is exact.
    r = lax.broadcasted_iota(jnp.int32, (8, 128), 0)
    c = lax.broadcasted_iota(jnp.int32, (8, 128), 1)
    out_ref[...] = jnp.where((r == 0) & (c == 0), partial, jnp.float32(0.0))


def _pick_tile_rows(n_rows, d, itemsize):
    # Sublane packing: f32 -> 8, bf16 -> 16, int8/fp8 -> 32.
    pack = max(8, 32 // itemsize)
    rows = max(pack, (_TARGET_BLOCK_ELEMS // d // pack) * pack)
    n_ceil = ((n_rows + pack - 1) // pack) * pack
    return min(rows, n_ceil)


@jax.jit
def neg_cosine(inp, tgt):
    """1 - mean(cosine_similarity(inp, tgt, dim=-1, eps=1e-6))."""
    assert inp.shape == tgt.shape
    d = inp.shape[-1]
    x = inp.reshape(-1, d)
    y = tgt.reshape(-1, d)
    n = x.shape[0]

    itemsize = jnp.dtype(inp.dtype).itemsize
    tile_rows = _pick_tile_rows(n, d, itemsize)
    num_tiles = pl.cdiv(n, tile_rows)

    kernel = functools.partial(_negcos_kernel, n_rows=n, tile_rows=tile_rows)

    partials = pl.pallas_call(
        kernel,
        out_shape=jax.ShapeDtypeStruct((num_tiles * 8, 128), jnp.float32),
        grid_spec=pltpu.PrefetchScalarGridSpec(
            num_scalar_prefetch=0,
            grid=(num_tiles,),
            in_specs=[
                pl.BlockSpec((tile_rows, d), lambda i: (i, 0)),
                pl.BlockSpec((tile_rows, d), lambda i: (i, 0)),
            ],
            out_specs=pl.BlockSpec((8, 128), lambda i: (i, 0)),
        ),
        compiler_params=pltpu.CompilerParams(
            dimension_semantics=("parallel",),
            vmem_limit_bytes=_VMEM_LIMIT_BYTES,
        ),
    )(x, y)

    mean_cos = jnp.sum(partials) / jnp.float32(n)
    return (jnp.float32(1.0) - mean_cos).astype(jnp.float32)


def _reference(inp, tgt):
    x = inp.astype(jnp.float32)
    y = tgt.astype(jnp.float32)
    dot = jnp.sum(x * y, axis=-1)
    w1 = jnp.sum(x * x, axis=-1)
    w2 = jnp.sum(y * y, axis=-1)
    cos = dot / jnp.sqrt(jnp.maximum(w1 * w2, _EPS * _EPS))
    return 1.0 - jnp.mean(cos)


if __name__ == "__main__":
    key = jax.random.PRNGKey(0)
    k1, k2 = jax.random.split(key)
    B, S, D = 2, 8, 32
    inp = jax.random.normal(k1, (B, S, D), dtype=jnp.float32)
    tgt = jax.random.normal(k2, (B, S, D), dtype=jnp.float32)

    out = jax.block_until_ready(neg_cosine(inp, tgt))

    ref = _reference(inp, tgt)
    assert jnp.allclose(out, ref, atol=1e-5, rtol=1e-5), (out, ref)
    print("KERNEL_OK")
</pallas_src>

<mosaic_0001>
module attributes {stable_mosaic.version = 11 : i64} {
  func.func @_negcos_kernel(%arg0: i32, %arg1: memref<16x32xf32, #tpu.memory_space<vmem>>, %arg2: memref<16x32xf32, #tpu.memory_space<vmem>>, %arg3: memref<8x128xf32, #tpu.memory_space<vmem>>) attributes {dimension_semantics = [#tpu.dimension_semantics<parallel>], iteration_bounds = array<i64: 1>, scalar_prefetch = 0 : i64, scratch_operands = 0 : i64, tpu.core_type = #tpu.core_type<tc>, window_params = [{transform_indices = @transform_0, window_bounds = array<i64: 16, 32>}, {transform_indices = @transform_1, window_bounds = array<i64: 16, 32>}, {transform_indices = @transform_2, window_bounds = array<i64: 8, 128>}]} {
    %c0 = arith.constant 0 : index
    %c0_0 = arith.constant 0 : index
    %0 = vector.load %arg1[%c0, %c0_0] : memref<16x32xf32, #tpu.memory_space<vmem>>, vector<16x32xf32>
    %c0_1 = arith.constant 0 : index
    %c0_2 = arith.constant 0 : index
    %1 = vector.load %arg2[%c0_1, %c0_2] : memref<16x32xf32, #tpu.memory_space<vmem>>, vector<16x32xf32>
    %2 = arith.mulf %0, %1 : vector<16x32xf32>
    %cst = arith.constant dense<0.000000e+00> : vector<16xf32>
    %3 = vector.multi_reduction <add>, %2, %cst [1] : vector<16x32xf32> to vector<16xf32>
    %4 = vector.shape_cast %3 : vector<16xf32> to vector<16x1xf32>
    %5 = arith.mulf %0, %0 : vector<16x32xf32>
    %cst_3 = arith.constant dense<0.000000e+00> : vector<16xf32>
    %6 = vector.multi_reduction <add>, %5, %cst_3 [1] : vector<16x32xf32> to vector<16xf32>
    %7 = vector.shape_cast %6 : vector<16xf32> to vector<16x1xf32>
    %8 = arith.mulf %1, %1 : vector<16x32xf32>
    %cst_4 = arith.constant dense<0.000000e+00> : vector<16xf32>
    %9 = vector.multi_reduction <add>, %8, %cst_4 [1] : vector<16x32xf32> to vector<16xf32>
    %10 = vector.shape_cast %9 : vector<16xf32> to vector<16x1xf32>
    %11 = arith.mulf %7, %10 : vector<16x1xf32>
    %cst_5 = arith.constant 9.99999996E-13 : f32
    %12 = vector.broadcast %cst_5 : f32 to vector<16x1xf32>
    %13 = arith.maximumf %11, %12 : vector<16x1xf32>
    %14 = math.rsqrt %13 : vector<16x1xf32>
    %15 = arith.mulf %4, %14 : vector<16x1xf32>
    %c16_i32 = arith.constant 16 : i32
    %16 = arith.muli %arg0, %c16_i32 : i32
    %17 = tpu.iota {dimensions = array<i32: 0>} : vector<16x1xi32>
    %18 = vector.broadcast %16 : i32 to vector<16x1xi32>
    %19 = arith.addi %18, %17 : vector<16x1xi32>
    %c16_i32_6 = arith.constant 16 : i32
    %20 = vector.broadcast %c16_i32_6 : i32 to vector<16x1xi32>
    %21 = arith.cmpi slt, %19, %20 : vector<16x1xi32>
    %cst_7 = arith.constant 0.000000e+00 : f32
    %22 = vector.broadcast %cst_7 : f32 to vector<16x1xf32>
    %23 = arith.select %21, %15, %22 : vector<16x1xi1>, vector<16x1xf32>
    %24 = vector.shape_cast %23 : vector<16x1xf32> to vector<1x16x1xf32>
    %cst_8 = arith.constant dense<0.000000e+00> : vector<1xf32>
    %25 = vector.multi_reduction <add>, %24, %cst_8 [1, 2] : vector<1x16x1xf32> to vector<1xf32>
    %26 = vector.shape_cast %25 : vector<1xf32> to vector<1x1x1xf32>
    %27 = vector.extract %26[0, 0, 0] : f32 from vector<1x1x1xf32>
    %28 = tpu.iota {dimensions = array<i32: 0>} : vector<8x128xi32>
    %29 = tpu.iota {dimensions = array<i32: 1>} : vector<8x128xi32>
    %c0_i32 = arith.constant 0 : i32
    %30 = vector.broadcast %c0_i32 : i32 to vector<8x128xi32>
    %31 = arith.cmpi eq, %28, %30 : vector<8x128xi32>
    %c0_i32_9 = arith.constant 0 : i32
    %32 = vector.broadcast %c0_i32_9 : i32 to vector<8x128xi32>
    %33 = arith.cmpi eq, %29, %32 : vector<8x128xi32>
    %34 = arith.andi %31, %33 : vector<8x128xi1>
    %cst_10 = arith.constant 0.000000e+00 : f32
    %35 = vector.broadcast %27 : f32 to vector<8x128xf32>
    %36 = vector.broadcast %cst_10 : f32 to vector<8x128xf32>
    %37 = arith.select %34, %35, %36 : vector<8x128xi1>, vector<8x128xf32>
    %c0_11 = arith.constant 0 : index
    %c0_12 = arith.constant 0 : index
    %38 = vector.load %arg3[%c0_11, %c0_12] : memref<8x128xf32, #tpu.memory_space<vmem>>, vector<8x128xf32>
    tpu.vector_store %arg3[%c0_11, %c0_12], %37 {strides = array<i32>} : memref<8x128xf32, #tpu.memory_space<vmem>>, vector<8x128xf32>,
    return
  }
  func.func @transform_0(%arg0: i32) -> (i32, i32) {
    %c0_i32 = arith.constant 0 : i32
    %c0_i32_0 = arith.constant 0 : i32
    return %arg0, %c0_i32 : i32, i32
  }
  func.func @transform_1(%arg0: i32) -> (i32, i32) {
    %c0_i32 = arith.constant 0 : i32
    %c0_i32_0 = arith.constant 0 : i32
    return %arg0, %c0_i32 : i32, i32
  }
  func.func @transform_2(%arg0: i32) -> (i32, i32) {
    %c0_i32 = arith.constant 0 : i32
    %c0_i32_0 = arith.constant 0 : i32
    return %arg0, %c0_i32 : i32, i32
  }
}

</mosaic_0001>

<llo_original>
// kernel: neg_cosine.1
$region0: #{neg_cosine.1}
  #allocation0 [shape = 'u32[]', space=smem, size = 0x4, offset = 0x4, fixed_abs, tag = 'smem constant byte address 0x4 - core index']
  #allocation1 [shape = 'u32[144,128]{1,0:T(1,128)}', space=vmem, size = 0x12000, scoped, tag = 'internal scratch']
  %s0 = inlined_call_operand.hbm [shape: f32[16,32], index: 0, kind: input, shape index: {}]
  %s1 = inlined_call_operand.hbm [shape: f32[16,32], index: 1, kind: input, shape index: {}]
  %s2 = inlined_call_operand.vmem [shape: f32[8,128], index: 2, kind: output, shape index: {}]
  %s3 = sld [smem:[#allocation0]]
  $region26: #{neg_cosine.1} parent=0
    _
  %s5 = ssub.s32 1, %s3
  %s6 = scalar_select 0, %s5, %s3
  $region1: #{neg_cosine.1} parent=0
    #allocation2 [shape = 'u8[8192]{0}', space=vmem, size = 0x2000, scoped, tag = 'input window, operand 0, single buffered']
    #allocation3 [shape = 's32[1]{0}', space=sflag, size = 0x4, scoped, tag = 'scoped memory for neg_cosine.1']
    #allocation4 [shape = 'u8[8192]{0}', space=vmem, size = 0x2000, scoped, tag = 'input window, operand 1, single buffered']
    #allocation5 [shape = 's32[1]{0}', space=sflag, size = 0x4, scoped, tag = 'scoped memory for neg_cosine.1']
    %7 = vsyncpa [#allocation3], 0
    %8 = vsyncpa [#allocation5], 0
    // Predicated region
    $region2: #{neg_cosine.1} parent=1 // pred_check
      _
    $region3: #{neg_cosine.1} parent=1 // pred_check_branch
      %10 = sbr.rel (0) target = $region5
    $region4: #{neg_cosine.1} parent=1 // pred_region
      %s12 = ssub.s32 256, 256
      %13 = vsyncadd [#allocation3], %s12
      %s14 = sshll.u32 [#allocation2], 4
      %s15 = int_to_ptr.vmem [resolvable:$true] %s14
      %20 = dma.hbm_to_vmem [thread:$0]  %s0, 256, %s15, [#allocation3], 128, 128, 8
    $region5: #{neg_cosine.1} parent=1 // pred_fallthru
      _
    // Predicated region
    $region6: #{neg_cosine.1} parent=1 // pred_check
      _
    $region7: #{neg_cosine.1} parent=1 // pred_check_branch
      %22 = sbr.rel (0) target = $region9
    $region8: #{neg_cosine.1} parent=1 // pred_region
      %s24 = ssub.s32 256, 256
      %25 = vsyncadd [#allocation5], %s24
      %s26 = sshll.u32 [#allocation4], 4
      %s27 = int_to_ptr.vmem [resolvable:$true] %s26
      %32 = dma.hbm_to_vmem [thread:$0]  %s1, 256, %s27, [#allocation5], 128, 128, 8
    $region9: #{neg_cosine.1} parent=1 // pred_fallthru
      _
    // Predicated region
    $region10: #{neg_cosine.1} parent=1 // pred_check
      _
    $region11: #{neg_cosine.1} parent=1 // pred_check_branch
      %34 = sbr.rel (0) target = $region13
    $region12: #{neg_cosine.1} parent=1 // pred_region
      %35 = dma.done [#allocation3], 256
    $region13: #{neg_cosine.1} parent=1 // pred_fallthru
      _
    // Predicated region
    $region14: #{neg_cosine.1} parent=1 // pred_check
      _
    $region15: #{neg_cosine.1} parent=1 // pred_check_branch
      %37 = sbr.rel (0) target = $region17
    $region16: #{neg_cosine.1} parent=1 // pred_region
      %38 = dma.done [#allocation5], 256
    $region17: #{neg_cosine.1} parent=1 // pred_fallthru
      _
    %v39 = vld [vmem:[#allocation2] sm:$0xff]
    %v40 = vld [vmem:[#allocation2 + $0x8] sm:$0xff]
    %v41 = vld [vmem:[#allocation4] sm:$0xff]
    %v42 = vld [vmem:[#allocation4 + $0x8] sm:$0xff]
    %v43 = vmul.f32 %v39, %v41
    %v44 = vmul.f32 %v40, %v42
    %vm45 = vcmask 261120
    %v46 = vsel %vm45, %v43, 0.0
    %47 = vadd.xlane.f32.xlu0 %v46
    %v48 = vpop.xlane.xlu0 %47
    %v49 = vsel %vm45, %v44, 0.0
    %50 = vadd.xlane.f32.xlu0 %v49
    %v51 = vpop.xlane.xlu0 %50
    %v52 = vmul.f32 %v39, %v39
    %v53 = vmul.f32 %v40, %v40
    %v54 = vsel %vm45, %v52, 0.0
    %55 = vadd.xlane.f32.xlu0 %v54
    %v56 = vpop.xlane.xlu0 %55
    %v57 = vsel %vm45, %v53, 0.0
    %58 = vadd.xlane.f32.xlu0 %v57
    %v59 = vpop.xlane.xlu0 %58
    %v60 = vmul.f32 %v41, %v41
    %v61 = vmul.f32 %v42, %v42
    %v62 = vsel %vm45, %v60, 0.0
    %63 = vadd.xlane.f32.xlu0 %v62
    %v64 = vpop.xlane.xlu0 %63
    %v65 = vsel %vm45, %v61, 0.0
    %66 = vadd.xlane.f32.xlu0 %v65
    %v67 = vpop.xlane.xlu0 %66
    %v68 = vmul.f32 %v56, %v64
    %v69 = vmul.f32 %v59, %v67
    %v70 = vmax.f32 %v68, 1e-12
    %v71 = vmax.f32 %v69, 1e-12
    %v72 = vrsqrt.pop %v70
    %v73 = vrsqrt.pop %v71
    %v74 = vmul.f32 %v48, %v72
    %v75 = vmul.f32 %v51, %v73
    %s76 = smul.u32 0, 16
    %v77 = vlaneseq
    %v78 = vshrl.u32 %v77, 7
    %v79 = vadd.s32 %v78, 8
    %v80 = vstv %s76
    %v81 = vadd.s32 %v80, %v78
    %v82 = vadd.s32 %v80, %v79
    %vm83 = vcmp.lt.s32.totalorder %v81, 16
    %vm84 = vcmp.lt.s32.totalorder %v82, 16
    %v85 = vsel %vm83, %v74, 0.0
    %v86 = vsel %vm84, %v75, 0.0
    %vm87 = vcmask 7168
    %v88 = vsel %vm87, %v85, 0.0
    %v89 = vsel %vm87, %v86, 0.0
    %v90 = vadd.f32 %v88, %v89
    %91 = vadd.xlane.f32.xlu0 %v90
    %v92 = vpop.xlane.xlu0 %91
    %v93 = vrot.slane %v92, 4
    %v94 = vadd.f32 %v92, %v93
    %v95 = vrot.slane %v94, 2
    %v96 = vadd.f32 %v94, %v95
    %v97 = vrot.slane %v96, 1
    %v98 = vadd.f32 %v96, %v97
    %s99 = vtos %v98
    %v100 = vlaneseq
    %v101 = vand.u32 %v100, 127
    %vm102 = vcmp.eq.s32.totalorder %v78, 0
    %vm103 = vcmp.eq.s32.totalorder %v101, 0
    %vm104 = vmand %vm102, %vm103
    %v105 = vstv %s99
    %v106 = vsel %vm104, %v105, 0.0
    %107 = vst [vmem:[%s2] sm:$0xff] %v106
    // Predicated region
    $region18: #{neg_cosine.1} parent=1 // pred_check
      _
    $region19: #{neg_cosine.1} parent=1 // pred_check_branch
      %109 = sbr.rel (0) target = $region21
    $region20: #{neg_cosine.1} parent=1 // pred_region
      _
    $region21: #{neg_cosine.1} parent=1 // pred_fallthru
      _
    // Predicated region
    $region22: #{neg_cosine.1} parent=1 // pred_check
      _
    $region23: #{neg_cosine.1} parent=1 // pred_check_branch
      %111 = sbr.rel (0) target = $region25
    $region24: #{neg_cosine.1} parent=1 // pred_region
      _
    $region25: #{neg_cosine.1} parent=1 // pred_fallthru
      _
    %112 = vsyncpa [#allocation3], 1
    %113 = vsyncpa [#allocation5], 1

</llo_original>
